<compile_context>
chip_gen: v7x
topology: tpu7x:2x2x1
jax: 0.10.0
libtpu: 0.0.40
codegen_flags: <defaults>
</compile_context>

<pallas_src>
import functools

import jax
import jax.numpy as jnp
from jax.experimental import pallas as pl
from jax.experimental.pallas import tpu as pltpu


def _binary_loss_kernel(x_ref, out_ref, acc_ref, *, n_valid):
    """x_ref: (2, tn) tile, row 0 = other-class score, row 1 = selected-class score."""
    i = pl.program_id(0)
    tn = x_ref.shape[1]

    @pl.when(i == 0)
    def _init():
        acc_ref[...] = jnp.zeros_like(acc_ref)

    x = x_ref[...].astype(jnp.float32)            # upcast in-register (keeps bf16 over DMA)
    d = x[0:1, :] - x[1:2, :]                     # (1, tn): other - selected
    # Numerically-stable softplus(d) = max(d, 0) + log(1 + exp(-|d|))
    sp = jnp.maximum(d, 0.0) + jnp.log(1.0 + jnp.exp(-jnp.abs(d)))

    # Mask lanes past the true sample count (partial last tile reads padded data).
    col = i * tn + jax.lax.broadcasted_iota(jnp.int32, (1, tn), 1)
    sp = jnp.where(col < n_valid, sp, 0.0)

    acc_ref[...] += jnp.sum(sp, axis=1, keepdims=True)

    @pl.when(i == pl.num_programs(0) - 1)
    def _finalize():
        out_ref[...] = acc_ref[...]


def binary_loss(pos_score: jax.Array, neg_score: jax.Array,
                *, max_lanes: int = 64 * 1024) -> jax.Array:
    """Scalar BinaryLoss. pos_score: [Np, 2], neg_score: [Nn, 2]."""
    assert pos_score.ndim == 2 and neg_score.ndim == 2
    # TODO(synk): kernel is specialized to the binary (C == 2) case the module is used with.
    assert pos_score.shape[1] == 2 and neg_score.shape[1] == 2

    # Layout plumbing only (no compute hoisted): present a lane-dense [2, Ntot]
    # slab with row 0 = other-class score and row 1 = selected-class score.
    #   pos: selected = col 1, other = col 0  ->  rows (col0, col1)
    #   neg: selected = col 0, other = col 1  ->  rows (col1, col0)
    pos_t = pos_score.T                      # [2, Np]
    neg_t = neg_score.T[::-1, :]             # [2, Nn], rows swapped
    x = jnp.concatenate([pos_t, neg_t], axis=1)   # [2, Ntot]
    n = x.shape[1]

    if n <= max_lanes:
        tn = n              # single full-array block (always a legal block shape)
    else:
        tn = max_lanes      # multiple of 128 -> unmasked, lane-dense tiles
    grid = (pl.cdiv(n, tn),)

    kernel = functools.partial(_binary_loss_kernel, n_valid=n)

    out = pl.pallas_call(
        kernel,
        out_shape=jax.ShapeDtypeStruct((1, 1), jnp.float32),
        grid_spec=pltpu.PrefetchScalarGridSpec(
            num_scalar_prefetch=0,
            grid=grid,
            in_specs=[pl.BlockSpec((2, tn), lambda i: (0, i))],
            out_specs=pl.BlockSpec((1, 1), lambda i: (0, 0)),
            scratch_shapes=[pltpu.VMEM((1, 1), jnp.float32)],
        ),
        compiler_params=pltpu.CompilerParams(
            # Reduction axis: the (1,1) output block stays resident across the grid.
            dimension_semantics=("arbitrary",),
        ),
    )(x)
    return out[0, 0]


def _reference(pos_score, neg_score):
    pos_ls = jax.nn.log_softmax(pos_score.astype(jnp.float32), axis=1)
    neg_ls = jax.nn.log_softmax(neg_score.astype(jnp.float32), axis=1)
    return jnp.sum(-pos_ls[:, 1]) + jnp.sum(-neg_ls[:, 0])


if __name__ == "__main__":
    key = jax.random.PRNGKey(0)
    k1, k2, k3, k4 = jax.random.split(key, 4)

    # Small binary-classification scores: [num_samples, 2]
    pos_score = jax.random.normal(k1, (8, 2), dtype=jnp.float32)
    neg_score = jax.random.normal(k2, (8, 2), dtype=jnp.float32)

    loss = jax.block_until_ready(binary_loss(pos_score, neg_score))
    ref = jax.block_until_ready(_reference(pos_score, neg_score))
    assert jnp.allclose(loss, ref, rtol=1e-5, atol=1e-5), (loss, ref)

    # Exercise the multi-tile grid + partial-tile masking path (small shapes,
    # tile width forced down so the grid has >1 step and a ragged last tile).
    pos_big = jax.random.normal(k3, (300, 2), dtype=jnp.float32)
    neg_big = jax.random.normal(k4, (200, 2), dtype=jnp.float32)
    loss2 = jax.block_until_ready(binary_loss(pos_big, neg_big, max_lanes=256))
    ref2 = jax.block_until_ready(_reference(pos_big, neg_big))
    assert jnp.allclose(loss2, ref2, rtol=1e-5, atol=1e-4), (loss2, ref2)

    print("KERNEL_OK")
</pallas_src>

<mosaic_0001>
module attributes {stable_mosaic.version = 11 : i64} {
  func.func @_binary_loss_kernel(%arg0: i32, %arg1: memref<2x16xf32, #tpu.memory_space<vmem>>, %arg2: memref<1x1xf32, #tpu.memory_space<vmem>>, %arg3: memref<1x1xf32, #tpu.memory_space<vmem>>) attributes {dimension_semantics = [#tpu.dimension_semantics<arbitrary>], iteration_bounds = array<i64: 1>, scalar_prefetch = 0 : i64, scratch_operands = 1 : i64, tpu.core_type = #tpu.core_type<tc>, window_params = [{transform_indices = @transform_0, window_bounds = array<i64: 2, 16>}, {pipeline_mode = #tpu.pipeline_mode<synchronous>, transform_indices = @transform_1, window_bounds = array<i64: 1, 1>}]} {
    %c0_i32 = arith.constant 0 : i32
    %0 = arith.cmpi eq, %arg0, %c0_i32 : i32
    %1 = arith.extui %0 : i1 to i32
    %c0_i32_0 = arith.constant 0 : i32
    %2 = arith.cmpi ne, %1, %c0_i32_0 : i32
    scf.if %2 {
      %cst_13 = arith.constant 0.000000e+00 : f32
      %33 = vector.broadcast %cst_13 : f32 to vector<1x1xf32>
      %c0_14 = arith.constant 0 : index
      %c0_15 = arith.constant 0 : index
      %34 = vector.load %arg3[%c0_14, %c0_15] : memref<1x1xf32, #tpu.memory_space<vmem>>, vector<1x1xf32>
      tpu.vector_store %arg3[%c0_14, %c0_15], %33 {strides = array<i32>} : memref<1x1xf32, #tpu.memory_space<vmem>>, vector<1x1xf32>,
    } else {
    }
    %c0 = arith.constant 0 : index
    %c0_1 = arith.constant 0 : index
    %3 = vector.load %arg1[%c0, %c0_1] : memref<2x16xf32, #tpu.memory_space<vmem>>, vector<2x16xf32>
    %4 = vector.extract_strided_slice %3 {offsets = [0, 0], sizes = [1, 16], strides = [1, 1]} : vector<2x16xf32> to vector<1x16xf32>
    %5 = vector.extract_strided_slice %3 {offsets = [1, 0], sizes = [1, 16], strides = [1, 1]} : vector<2x16xf32> to vector<1x16xf32>
    %6 = arith.subf %4, %5 : vector<1x16xf32>
    %cst = arith.constant 0.000000e+00 : f32
    %7 = vector.broadcast %cst : f32 to vector<1x16xf32>
    %8 = arith.maximumf %6, %7 : vector<1x16xf32>
    %9 = math.absf %6 : vector<1x16xf32>
    %cst_2 = arith.constant 0.000000e+00 : f32
    %10 = vector.broadcast %cst_2 : f32 to vector<1x16xf32>
    %11 = arith.subf %10, %9 : vector<1x16xf32>
    %12 = math.exp %11 : vector<1x16xf32>
    %cst_3 = arith.constant 1.000000e+00 : f32
    %13 = vector.broadcast %cst_3 : f32 to vector<1x16xf32>
    %14 = arith.addf %13, %12 : vector<1x16xf32>
    %15 = math.log %14 : vector<1x16xf32>
    %16 = arith.addf %8, %15 : vector<1x16xf32>
    %c16_i32 = arith.constant 16 : i32
    %17 = arith.muli %arg0, %c16_i32 : i32
    %18 = tpu.iota {dimensions = array<i32: 1>} : vector<1x16xi32>
    %19 = vector.broadcast %17 : i32 to vector<1x16xi32>
    %20 = arith.addi %19, %18 : vector<1x16xi32>
    %c16_i32_4 = arith.constant 16 : i32
    %21 = vector.broadcast %c16_i32_4 : i32 to vector<1x16xi32>
    %22 = arith.cmpi slt, %20, %21 : vector<1x16xi32>
    %cst_5 = arith.constant 0.000000e+00 : f32
    %23 = vector.broadcast %cst_5 : f32 to vector<1x16xf32>
    %24 = arith.select %22, %16, %23 : vector<1x16xi1>, vector<1x16xf32>
    %c0_6 = arith.constant 0 : index
    %c0_7 = arith.constant 0 : index
    %25 = vector.load %arg3[%c0_6, %c0_7] : memref<1x1xf32, #tpu.memory_space<vmem>>, vector<1x1xf32>
    %cst_8 = arith.constant dense<0.000000e+00> : vector<1xf32>
    %26 = vector.multi_reduction <add>, %24, %cst_8 [1] : vector<1x16xf32> to vector<1xf32>
    %27 = vector.shape_cast %26 : vector<1xf32> to vector<1x1xf32>
    %28 = arith.addf %25, %27 : vector<1x1xf32>
    %c0_9 = arith.constant 0 : index
    %c0_10 = arith.constant 0 : index
    %29 = vector.load %arg3[%c0_9, %c0_10] : memref<1x1xf32, #tpu.memory_space<vmem>>, vector<1x1xf32>
    tpu.vector_store %arg3[%c0_9, %c0_10], %28 {strides = array<i32>} : memref<1x1xf32, #tpu.memory_space<vmem>>, vector<1x1xf32>,
    %c0_i32_11 = arith.constant 0 : i32
    %30 = arith.cmpi eq, %arg0, %c0_i32_11 : i32
    %31 = arith.extui %30 : i1 to i32
    %c0_i32_12 = arith.constant 0 : i32
    %32 = arith.cmpi ne, %31, %c0_i32_12 : i32
    scf.if %32 {
      %c0_13 = arith.constant 0 : index
      %c0_14 = arith.constant 0 : index
      %33 = vector.load %arg3[%c0_13, %c0_14] : memref<1x1xf32, #tpu.memory_space<vmem>>, vector<1x1xf32>
      %c0_15 = arith.constant 0 : index
      %c0_16 = arith.constant 0 : index
      %34 = vector.load %arg2[%c0_15, %c0_16] : memref<1x1xf32, #tpu.memory_space<vmem>>, vector<1x1xf32>
      tpu.vector_store %arg2[%c0_15, %c0_16], %33 {strides = array<i32>} : memref<1x1xf32, #tpu.memory_space<vmem>>, vector<1x1xf32>,
    } else {
    }
    return
  }
  func.func @transform_0(%arg0: i32) -> (i32, i32) {
    %c0_i32 = arith.constant 0 : i32
    %c0_i32_0 = arith.constant 0 : i32
    return %c0_i32, %arg0 : i32, i32
  }
  func.func @transform_1(%arg0: i32) -> (i32, i32) {
    %c0_i32 = arith.constant 0 : i32
    %c0_i32_0 = arith.constant 0 : i32
    %c0_i32_1 = arith.constant 0 : i32
    return %c0_i32, %c0_i32_0 : i32, i32
  }
}

</mosaic_0001>

<llo_original>
// kernel: tpu_custom_call.1
$region0: #{tpu_custom_call.1}
  #allocation0 [shape = 'u32[]', space=smem, size = 0x4, offset = 0x4, fixed_abs, tag = 'smem constant byte address 0x4 - core index']
  #allocation1 [shape = 'u32[144,128]{1,0:T(1,128)}', space=vmem, size = 0x12000, scoped, tag = 'internal scratch']
  #allocation2 [shape = 'f32[1,1]{1,0:T(1,128)}', space=vmem, size = 0x200, scoped, tag = 'scratch operand']
  %s0 = inlined_call_operand.hbm [shape: f32[2,16], index: 0, kind: input, shape index: {}]
  %s1 = inlined_call_operand.hbm [shape: f32[1,1], index: 1, kind: output, shape index: {}]
  %s2 = sld [smem:[#allocation0]]
  $region26: #{tpu_custom_call.1} parent=0
    _
  %s4 = ssub.s32 1, %s2
  %s5 = scalar_select 0, %s4, %s2
  $region1: #{tpu_custom_call.1} parent=0
    #allocation3 [shape = 'u8[1024]{0}', space=vmem, size = 0x400, scoped, tag = 'input window, operand 0, single buffered']
    #allocation4 [shape = 's32[1]{0}', space=sflag, size = 0x4, scoped, tag = 'scoped memory for tpu_custom_call.1']
    #allocation5 [shape = 's32[1]{0}', space=sflag, size = 0x4, scoped, tag = 'scoped memory for tpu_custom_call.1']
    #allocation6 [shape = 'u8[512]{0}', space=vmem, size = 0x400, scoped, tag = 'output window, operand 0, single buffered']
    %6 = vsyncpa [#allocation4], 0
    %7 = vsyncpa [#allocation5], 0
    // Predicated region
    $region2: #{tpu_custom_call.1} parent=1 // pred_check
      _
    $region3: #{tpu_custom_call.1} parent=1 // pred_check_branch
      %9 = sbr.rel (0) target = $region5
    $region4: #{tpu_custom_call.1} parent=1 // pred_region
      %s11 = ssub.s32 32, 32
      %12 = vsyncadd [#allocation4], %s11
      %s14 = sshll.u32 [#allocation3], 4
      %s15 = int_to_ptr.vmem [resolvable:$true] %s14
      %17 = dma.hbm_to_vmem [thread:$0]  %s0, 32, %s15, [#allocation4]
    $region5: #{tpu_custom_call.1} parent=1 // pred_fallthru
      _
    // Predicated region
    $region6: #{tpu_custom_call.1} parent=1 // pred_check
      _
    $region7: #{tpu_custom_call.1} parent=1 // pred_check_branch
      %19 = sbr.rel (0) target = $region9
    $region8: #{tpu_custom_call.1} parent=1 // pred_region
      %20 = dma.done [#allocation4], 32
    $region9: #{tpu_custom_call.1} parent=1 // pred_fallthru
      _
    %p21 = scmp.eq.s32.totalorder 0, 0
    // Predicated region
    $region10: #{tpu_custom_call.1} parent=1 // pred_check
      %p22 = pneg %p21
    $region11: #{tpu_custom_call.1} parent=1 // pred_check_branch
      %24 = sbr.rel (%p22) target = $region13
    $region12: #{tpu_custom_call.1} parent=1 // pred_region
      %vm25 = vcmask 0
      %26 = vst.msk [vmem:[#allocation2] sm:$0x1] %vm25, 0.0
    $region13: #{tpu_custom_call.1} parent=1 // pred_fallthru
      _
    %v27 = vld [vmem:[#allocation3] sm:$0x3]
    %v29 = vrot.slane %v27, 1
    %v31 = vsub.f32 %v27, %v29
    %v32 = vmax.f32 %v31, 0.0
    %v33 = vand.u32 2147483647, %v31
    %v34 = vsub.f32 0.0, %v33
    %v35 = vmul.f32 %v34, 1.442695
    %v36 = vpow.pop %v35
    %v37 = vadd.f32 %v36, 1.0
    %v38 = vlog2.pop %v37
    %v39 = vmul.f32 %v38, 0.6931472
    %v40 = vadd.f32 %v32, %v39
    %s41 = smul.u32 0, 16
    %v42 = vlaneseq
    %v43 = vand.u32 %v42, 127
    %v44 = vstv %s41
    %v45 = vadd.s32 %v44, %v43
    %vm46 = vcmp.lt.s32.totalorder %v45, 16
    %v47 = vsel %vm46, %v40, 0.0
    %v48 = vld [vmem:[#allocation2] sm:$0x1]
    %vm49 = vcmask 122880
    %v50 = vsel %vm49, %v47, 0.0
    %51 = vadd.xlane.f32.xlu0 %v50
    %v52 = vpop.xlane.xlu0 %51
    %v53 = vadd.f32 %v48, %v52
    %vm54 = vcmask 0
    %55 = vst.msk [vmem:[#allocation2] sm:$0x1] %vm54, %v53
    // Predicated region
    $region14: #{tpu_custom_call.1} parent=1 // pred_check
      %p56 = pneg %p21
    $region15: #{tpu_custom_call.1} parent=1 // pred_check_branch
      %58 = sbr.rel (%p56) target = $region17
    $region16: #{tpu_custom_call.1} parent=1 // pred_region
      %v59 = vld [vmem:[#allocation2] sm:$0x1]
      %60 = vst.msk [vmem:[#allocation6] sm:$0x1] %vm54, %v59
    $region17: #{tpu_custom_call.1} parent=1 // pred_fallthru
      _
    // Predicated region
    $region18: #{tpu_custom_call.1} parent=1 // pred_check
      _
    $region19: #{tpu_custom_call.1} parent=1 // pred_check_branch
      %62 = sbr.rel (0) target = $region21
    $region20: #{tpu_custom_call.1} parent=1 // pred_region
      %s64 = ssub.s32 16, 16
      %65 = vsyncadd [#allocation5], %s64
      %s67 = sshll.u32 [#allocation6], 4
      %s68 = int_to_ptr.vmem [resolvable:$true] %s67
      %70 = dma.vmem_to_hbm [thread:$0]  %s68, 16, %s1, [#allocation5]
    $region21: #{tpu_custom_call.1} parent=1 // pred_fallthru
      _
    // Predicated region
    $region22: #{tpu_custom_call.1} parent=1 // pred_check
      _
    $region23: #{tpu_custom_call.1} parent=1 // pred_check_branch
      %72 = sbr.rel (0) target = $region25
    $region24: #{tpu_custom_call.1} parent=1 // pred_region
      %73 = dma.done [#allocation5], 16
    $region25: #{tpu_custom_call.1} parent=1 // pred_fallthru
      _
    %74 = vsyncpa [#allocation4], 1
    %75 = vsyncpa [#allocation5], 1

</llo_original>
